<compile_context>
chip_gen: v7x
topology: tpu7x:2x2x1
jax: 0.10.0
libtpu: 0.0.40
codegen_flags: <defaults>
</compile_context>

<pallas_src>
import functools

import jax
import jax.numpy as jnp
from jax.experimental import pallas as pl
from jax.experimental.pallas import tpu as pltpu

_LANE = 128
_SUBLANE = 8
# Conservative double-buffered input budget: safe on v7x (64 MiB physical VMEM).
_VMEM_TILE_BUDGET = 24 * 1024 * 1024
_VMEM_LIMIT_BYTES = 48 * 1024 * 1024


def _round_up(x: int, m: int) -> int:
    return ((x + m - 1) // m) * m


def _choose_tiles(B: int, D: int, itemsize: int) -> tuple[int, int]:
    """Pick (tb, tk) from a VMEM budget.

    Per-element cost: 2 inputs x 2 pipeline buffers x itemsize, plus one f32
    compute temporary per input (for the upcast when inputs are not f32).
    """
    bytes_per_elem = 2 * (2 * itemsize + 4)
    max_elems = max(_VMEM_TILE_BUDGET // bytes_per_elem, _SUBLANE * _LANE)

    d_pad = _round_up(D, _LANE)
    if d_pad * _SUBLANE <= max_elems:
        tk = d_pad                                   # whole feature dim per block
    else:
        # Tile the reduction axis; keep tk a multiple of the lane width.
        tk = max(_LANE, (max_elems // _SUBLANE) // _LANE * _LANE)

    tb = max(_SUBLANE, (max_elems // tk) // _SUBLANE * _SUBLANE)
    # >=512-row blocks already sit at ~85% of the HBM roofline; capping keeps
    # the grid >= 2 steps for realistic batches (lets v7x use both TCs).
    tb = min(tb, 512)
    tb = min(tb, _round_up(B, _SUBLANE))             # never exceed padded batch
    return tb, tk


def _cosine_distance_kernel(x1_ref, x2_ref, o_ref,
                            dot_acc, s1_acc, s2_acc, *, eps: float):
    k = pl.program_id(1)

    @pl.when(k == 0)
    def _init():
        dot_acc[...] = jnp.zeros_like(dot_acc)
        s1_acc[...] = jnp.zeros_like(s1_acc)
        s2_acc[...] = jnp.zeros_like(s2_acc)

    x1 = x1_ref[...].astype(jnp.float32)
    x2 = x2_ref[...].astype(jnp.float32)

    dot_acc[...] += jnp.sum(x1 * x2, axis=-1, keepdims=True)   # (tb, 1)
    s1_acc[...] += jnp.sum(x1 * x1, axis=-1, keepdims=True)    # (tb, 1)
    s2_acc[...] += jnp.sum(x2 * x2, axis=-1, keepdims=True)    # (tb, 1)

    @pl.when(k == pl.num_programs(1) - 1)
    def _finalize():
        # sim = dot / max(sqrt(s1*s2), eps)  ==  dot * rsqrt(max(s1*s2, eps^2))
        denom_sq = jnp.maximum(s1_acc[...] * s2_acc[...], jnp.float32(eps * eps))
        sim = dot_acc[...] * jax.lax.rsqrt(denom_sq)
        o_ref[...] = (jnp.float32(1.0) - sim).astype(o_ref.dtype)


def cosine_distance(x1: jax.Array, x2: jax.Array, eps: float = 1e-8,
                    block_b: int | None = None,
                    block_k: int | None = None) -> jax.Array:
    """1 - cosine_similarity(x1, x2, dim=1, eps) for (B, D) inputs."""
    assert x1.shape == x2.shape and x1.ndim == 2
    B, D = x1.shape
    out_dtype = x1.dtype if jnp.issubdtype(x1.dtype, jnp.floating) else jnp.float32

    tb, tk = _choose_tiles(B, D, jnp.dtype(x1.dtype).itemsize)
    if block_b is not None:
        tb = block_b
    if block_k is not None:
        tk = block_k

    # Zero-pad to tile multiples: padded feature columns contribute 0 to every
    # sum; padded batch rows produce garbage values that are sliced away.
    B_pad = _round_up(B, tb)
    D_pad = _round_up(D, tk)
    if (B_pad, D_pad) != (B, D):
        x1 = jnp.pad(x1, ((0, B_pad - B), (0, D_pad - D)))
        x2 = jnp.pad(x2, ((0, B_pad - B), (0, D_pad - D)))

    grid = (B_pad // tb, D_pad // tk)

    out2d = pl.pallas_call(
        functools.partial(_cosine_distance_kernel, eps=eps),
        out_shape=jax.ShapeDtypeStruct((B_pad, 1), out_dtype),
        grid_spec=pltpu.PrefetchScalarGridSpec(
            num_scalar_prefetch=0,
            grid=grid,
            in_specs=[
                pl.BlockSpec((tb, tk), lambda i, k: (i, k)),
                pl.BlockSpec((tb, tk), lambda i, k: (i, k)),
            ],
            out_specs=pl.BlockSpec((tb, 1), lambda i, k: (i, 0)),
            scratch_shapes=[
                pltpu.VMEM((tb, 1), jnp.float32),   # dot accumulator
                pltpu.VMEM((tb, 1), jnp.float32),   # ||x1||^2 accumulator
                pltpu.VMEM((tb, 1), jnp.float32),   # ||x2||^2 accumulator
            ],
        ),
        compiler_params=pltpu.CompilerParams(
            dimension_semantics=("parallel", "arbitrary"),
            vmem_limit_bytes=_VMEM_LIMIT_BYTES,
        ),
    )(x1, x2)
    return out2d[:B, 0]


def _reference(x1, x2, eps=1e-8):
    x1 = x1.astype(jnp.float32)
    x2 = x2.astype(jnp.float32)
    dot = jnp.sum(x1 * x2, axis=1)
    n1 = jnp.sqrt(jnp.sum(x1 * x1, axis=1))
    n2 = jnp.sqrt(jnp.sum(x2 * x2, axis=1))
    return 1.0 - dot / jnp.maximum(n1 * n2, eps)


if __name__ == "__main__":
    key = jax.random.PRNGKey(0)

    # Case 1: small demo shapes (batch=8, hidden=32) — single-block path.
    k1, k2, k3, k4, k5, k6 = jax.random.split(key, 6)
    B, D = 8, 32
    x1 = jax.random.normal(k1, (B, D), dtype=jnp.float32)
    x2 = jax.random.normal(k2, (B, D), dtype=jnp.float32)
    out = jax.block_until_ready(cosine_distance(x1, x2))
    assert out.shape == (B,)
    assert jnp.allclose(out, _reference(x1, x2), atol=1e-5, rtol=1e-5)

    # Case 2: batch not a multiple of the tile -> exercises the padding path.
    B, D = 10, 160
    a1 = jax.random.normal(k3, (B, D), dtype=jnp.float32)
    a2 = jax.random.normal(k4, (B, D), dtype=jnp.float32)
    out = jax.block_until_ready(cosine_distance(a1, a2))
    assert out.shape == (B,)
    assert jnp.allclose(out, _reference(a1, a2), atol=1e-5, rtol=1e-5)

    # Case 3: force small tiles -> exercises the D-tiled accumulator path.
    B, D = 16, 512
    b1 = jax.random.normal(k5, (B, D), dtype=jnp.float32)
    b2 = jax.random.normal(k6, (B, D), dtype=jnp.float32)
    out = jax.block_until_ready(cosine_distance(b1, b2, block_b=8, block_k=128))
    assert out.shape == (B,)
    assert jnp.allclose(out, _reference(b1, b2), atol=1e-5, rtol=1e-5)

    print("KERNEL_OK")
</pallas_src>

<mosaic_0001>
module attributes {stable_mosaic.version = 11 : i64} {
  func.func @_cosine_distance_kernel(%arg0: i32, %arg1: i32, %arg2: memref<8x128xf32, #tpu.memory_space<vmem>>, %arg3: memref<8x128xf32, #tpu.memory_space<vmem>>, %arg4: memref<8x1xf32, #tpu.memory_space<vmem>>, %arg5: memref<8x1xf32, #tpu.memory_space<vmem>>, %arg6: memref<8x1xf32, #tpu.memory_space<vmem>>, %arg7: memref<8x1xf32, #tpu.memory_space<vmem>>) attributes {dimension_semantics = [#tpu.dimension_semantics<parallel>, #tpu.dimension_semantics<arbitrary>], iteration_bounds = array<i64: 1, 1>, scalar_prefetch = 0 : i64, scratch_operands = 3 : i64, tpu.core_type = #tpu.core_type<tc>, window_params = [{transform_indices = @transform_0, window_bounds = array<i64: 8, 128>}, {transform_indices = @transform_1, window_bounds = array<i64: 8, 128>}, {transform_indices = @transform_2, window_bounds = array<i64: 8, 1>}]} {
    %c0_i32 = arith.constant 0 : i32
    %0 = arith.cmpi eq, %arg1, %c0_i32 : i32
    %1 = arith.extui %0 : i1 to i32
    %c0_i32_0 = arith.constant 0 : i32
    %2 = arith.cmpi ne, %1, %c0_i32_0 : i32
    scf.if %2 {
      %cst_20 = arith.constant 0.000000e+00 : f32
      %26 = vector.broadcast %cst_20 : f32 to vector<8x1xf32>
      %c0_21 = arith.constant 0 : index
      %c0_22 = arith.constant 0 : index
      %27 = vector.load %arg5[%c0_21, %c0_22] : memref<8x1xf32, #tpu.memory_space<vmem>>, vector<8x1xf32>
      tpu.vector_store %arg5[%c0_21, %c0_22], %26 {strides = array<i32>} : memref<8x1xf32, #tpu.memory_space<vmem>>, vector<8x1xf32>,
      %cst_23 = arith.constant 0.000000e+00 : f32
      %28 = vector.broadcast %cst_23 : f32 to vector<8x1xf32>
      %c0_24 = arith.constant 0 : index
      %c0_25 = arith.constant 0 : index
      %29 = vector.load %arg6[%c0_24, %c0_25] : memref<8x1xf32, #tpu.memory_space<vmem>>, vector<8x1xf32>
      tpu.vector_store %arg6[%c0_24, %c0_25], %28 {strides = array<i32>} : memref<8x1xf32, #tpu.memory_space<vmem>>, vector<8x1xf32>,
      %cst_26 = arith.constant 0.000000e+00 : f32
      %30 = vector.broadcast %cst_26 : f32 to vector<8x1xf32>
      %c0_27 = arith.constant 0 : index
      %c0_28 = arith.constant 0 : index
      %31 = vector.load %arg7[%c0_27, %c0_28] : memref<8x1xf32, #tpu.memory_space<vmem>>, vector<8x1xf32>
      tpu.vector_store %arg7[%c0_27, %c0_28], %30 {strides = array<i32>} : memref<8x1xf32, #tpu.memory_space<vmem>>, vector<8x1xf32>,
    } else {
    }
    %c0 = arith.constant 0 : index
    %c0_1 = arith.constant 0 : index
    %3 = vector.load %arg2[%c0, %c0_1] : memref<8x128xf32, #tpu.memory_space<vmem>>, vector<8x128xf32>
    %c0_2 = arith.constant 0 : index
    %c0_3 = arith.constant 0 : index
    %4 = vector.load %arg3[%c0_2, %c0_3] : memref<8x128xf32, #tpu.memory_space<vmem>>, vector<8x128xf32>
    %c0_4 = arith.constant 0 : index
    %c0_5 = arith.constant 0 : index
    %5 = vector.load %arg5[%c0_4, %c0_5] : memref<8x1xf32, #tpu.memory_space<vmem>>, vector<8x1xf32>
    %6 = arith.mulf %3, %4 : vector<8x128xf32>
    %cst = arith.constant dense<0.000000e+00> : vector<8xf32>
    %7 = vector.multi_reduction <add>, %6, %cst [1] : vector<8x128xf32> to vector<8xf32>
    %8 = vector.shape_cast %7 : vector<8xf32> to vector<8x1xf32>
    %9 = arith.addf %5, %8 : vector<8x1xf32>
    %c0_6 = arith.constant 0 : index
    %c0_7 = arith.constant 0 : index
    %10 = vector.load %arg5[%c0_6, %c0_7] : memref<8x1xf32, #tpu.memory_space<vmem>>, vector<8x1xf32>
    tpu.vector_store %arg5[%c0_6, %c0_7], %9 {strides = array<i32>} : memref<8x1xf32, #tpu.memory_space<vmem>>, vector<8x1xf32>,
    %c0_8 = arith.constant 0 : index
    %c0_9 = arith.constant 0 : index
    %11 = vector.load %arg6[%c0_8, %c0_9] : memref<8x1xf32, #tpu.memory_space<vmem>>, vector<8x1xf32>
    %12 = arith.mulf %3, %3 : vector<8x128xf32>
    %cst_10 = arith.constant dense<0.000000e+00> : vector<8xf32>
    %13 = vector.multi_reduction <add>, %12, %cst_10 [1] : vector<8x128xf32> to vector<8xf32>
    %14 = vector.shape_cast %13 : vector<8xf32> to vector<8x1xf32>
    %15 = arith.addf %11, %14 : vector<8x1xf32>
    %c0_11 = arith.constant 0 : index
    %c0_12 = arith.constant 0 : index
    %16 = vector.load %arg6[%c0_11, %c0_12] : memref<8x1xf32, #tpu.memory_space<vmem>>, vector<8x1xf32>
    tpu.vector_store %arg6[%c0_11, %c0_12], %15 {strides = array<i32>} : memref<8x1xf32, #tpu.memory_space<vmem>>, vector<8x1xf32>,
    %c0_13 = arith.constant 0 : index
    %c0_14 = arith.constant 0 : index
    %17 = vector.load %arg7[%c0_13, %c0_14] : memref<8x1xf32, #tpu.memory_space<vmem>>, vector<8x1xf32>
    %18 = arith.mulf %4, %4 : vector<8x128xf32>
    %cst_15 = arith.constant dense<0.000000e+00> : vector<8xf32>
    %19 = vector.multi_reduction <add>, %18, %cst_15 [1] : vector<8x128xf32> to vector<8xf32>
    %20 = vector.shape_cast %19 : vector<8xf32> to vector<8x1xf32>
    %21 = arith.addf %17, %20 : vector<8x1xf32>
    %c0_16 = arith.constant 0 : index
    %c0_17 = arith.constant 0 : index
    %22 = vector.load %arg7[%c0_16, %c0_17] : memref<8x1xf32, #tpu.memory_space<vmem>>, vector<8x1xf32>
    tpu.vector_store %arg7[%c0_16, %c0_17], %21 {strides = array<i32>} : memref<8x1xf32, #tpu.memory_space<vmem>>, vector<8x1xf32>,
    %c0_i32_18 = arith.constant 0 : i32
    %23 = arith.cmpi eq, %arg1, %c0_i32_18 : i32
    %24 = arith.extui %23 : i1 to i32
    %c0_i32_19 = arith.constant 0 : i32
    %25 = arith.cmpi ne, %24, %c0_i32_19 : i32
    scf.if %25 {
      %c0_20 = arith.constant 0 : index
      %c0_21 = arith.constant 0 : index
      %26 = vector.load %arg6[%c0_20, %c0_21] : memref<8x1xf32, #tpu.memory_space<vmem>>, vector<8x1xf32>
      %c0_22 = arith.constant 0 : index
      %c0_23 = arith.constant 0 : index
      %27 = vector.load %arg7[%c0_22, %c0_23] : memref<8x1xf32, #tpu.memory_space<vmem>>, vector<8x1xf32>
      %28 = arith.mulf %26, %27 : vector<8x1xf32>
      %cst_24 = arith.constant 1.000000e-16 : f32
      %29 = vector.broadcast %cst_24 : f32 to vector<8x1xf32>
      %30 = arith.maximumf %28, %29 : vector<8x1xf32>
      %c0_25 = arith.constant 0 : index
      %c0_26 = arith.constant 0 : index
      %31 = vector.load %arg5[%c0_25, %c0_26] : memref<8x1xf32, #tpu.memory_space<vmem>>, vector<8x1xf32>
      %32 = math.rsqrt %30 : vector<8x1xf32>
      %33 = arith.mulf %31, %32 : vector<8x1xf32>
      %cst_27 = arith.constant 1.000000e+00 : f32
      %34 = vector.broadcast %cst_27 : f32 to vector<8x1xf32>
      %35 = arith.subf %34, %33 : vector<8x1xf32>
      %c0_28 = arith.constant 0 : index
      %c0_29 = arith.constant 0 : index
      %36 = vector.load %arg4[%c0_28, %c0_29] : memref<8x1xf32, #tpu.memory_space<vmem>>, vector<8x1xf32>
      tpu.vector_store %arg4[%c0_28, %c0_29], %35 {strides = array<i32>} : memref<8x1xf32, #tpu.memory_space<vmem>>, vector<8x1xf32>,
    } else {
    }
    return
  }
  func.func @transform_0(%arg0: i32, %arg1: i32) -> (i32, i32) {
    %c0_i32 = arith.constant 0 : i32
    return %arg0, %arg1 : i32, i32
  }
  func.func @transform_1(%arg0: i32, %arg1: i32) -> (i32, i32) {
    %c0_i32 = arith.constant 0 : i32
    return %arg0, %arg1 : i32, i32
  }
  func.func @transform_2(%arg0: i32, %arg1: i32) -> (i32, i32) {
    %c0_i32 = arith.constant 0 : i32
    %c0_i32_0 = arith.constant 0 : i32
    return %arg0, %c0_i32 : i32, i32
  }
}

</mosaic_0001>

<llo_original>
// kernel: tpu_custom_call.1
$region0: #{tpu_custom_call.1}
  #allocation0 [shape = 'u32[]', space=smem, size = 0x4, offset = 0x4, fixed_abs, tag = 'smem constant byte address 0x4 - core index']
  #allocation1 [shape = 'u32[144,128]{1,0:T(1,128)}', space=vmem, size = 0x12000, scoped, tag = 'internal scratch']
  #allocation2 [shape = 'f32[8,1]{1,0:T(8,128)}', space=vmem, size = 0x1000, scoped, tag = 'scratch operand']
  #allocation3 [shape = 'f32[8,1]{1,0:T(8,128)}', space=vmem, size = 0x1000, scoped, tag = 'scratch operand']
  #allocation4 [shape = 'f32[8,1]{1,0:T(8,128)}', space=vmem, size = 0x1000, scoped, tag = 'scratch operand']
  %s0 = inlined_call_operand.hbm [shape: f32[8,128], index: 0, kind: input, shape index: {}]
  %s1 = inlined_call_operand.hbm [shape: f32[8,128], index: 1, kind: input, shape index: {}]
  %s2 = inlined_call_operand.vmem [shape: f32[8,1], index: 2, kind: output, shape index: {}]
  %s3 = sld [smem:[#allocation0]]
  $region34: #{tpu_custom_call.1} parent=0
    _
  %s5 = ssub.s32 1, %s3
  %s6 = scalar_select 0, %s5, %s3
  $region1: #{tpu_custom_call.1} parent=0
    #allocation5 [shape = 'u8[4096]{0}', space=vmem, size = 0x1000, scoped, tag = 'input window, operand 0, single buffered']
    #allocation6 [shape = 's32[1]{0}', space=sflag, size = 0x4, scoped, tag = 'scoped memory for tpu_custom_call.1']
    #allocation7 [shape = 'u8[4096]{0}', space=vmem, size = 0x1000, scoped, tag = 'input window, operand 1, single buffered']
    #allocation8 [shape = 's32[1]{0}', space=sflag, size = 0x4, scoped, tag = 'scoped memory for tpu_custom_call.1']
    %7 = vsyncpa [#allocation6], 0
    %8 = vsyncpa [#allocation8], 0
    // Predicated region
    $region2: #{tpu_custom_call.1} parent=1 // pred_check
      _
    $region3: #{tpu_custom_call.1} parent=1 // pred_check_branch
      %10 = sbr.rel (0) target = $region5
    $region4: #{tpu_custom_call.1} parent=1 // pred_region
      %s12 = ssub.s32 128, 128
      %13 = vsyncadd [#allocation6], %s12
      %s15 = sshll.u32 [#allocation5], 4
      %s16 = int_to_ptr.vmem [resolvable:$true] %s15
      %18 = dma.hbm_to_vmem [thread:$0]  %s0, 128, %s16, [#allocation6]
    $region5: #{tpu_custom_call.1} parent=1 // pred_fallthru
      _
    // Predicated region
    $region6: #{tpu_custom_call.1} parent=1 // pred_check
      _
    $region7: #{tpu_custom_call.1} parent=1 // pred_check_branch
      %20 = sbr.rel (0) target = $region9
    $region8: #{tpu_custom_call.1} parent=1 // pred_region
      %s22 = ssub.s32 128, 128
      %23 = vsyncadd [#allocation8], %s22
      %s25 = sshll.u32 [#allocation7], 4
      %s26 = int_to_ptr.vmem [resolvable:$true] %s25
      %28 = dma.hbm_to_vmem [thread:$0]  %s1, 128, %s26, [#allocation8]
    $region9: #{tpu_custom_call.1} parent=1 // pred_fallthru
      _
    // Predicated region
    $region10: #{tpu_custom_call.1} parent=1 // pred_check
      _
    $region11: #{tpu_custom_call.1} parent=1 // pred_check_branch
      %30 = sbr.rel (0) target = $region13
    $region12: #{tpu_custom_call.1} parent=1 // pred_region
      %31 = dma.done [#allocation6], 128
    $region13: #{tpu_custom_call.1} parent=1 // pred_fallthru
      _
    // Predicated region
    $region14: #{tpu_custom_call.1} parent=1 // pred_check
      _
    $region15: #{tpu_custom_call.1} parent=1 // pred_check_branch
      %33 = sbr.rel (0) target = $region17
    $region16: #{tpu_custom_call.1} parent=1 // pred_region
      %34 = dma.done [#allocation8], 128
    $region17: #{tpu_custom_call.1} parent=1 // pred_fallthru
      _
    %p35 = scmp.eq.s32.totalorder 0, 0
    // Predicated region
    $region18: #{tpu_custom_call.1} parent=1 // pred_check
      %p36 = pneg %p35
    $region19: #{tpu_custom_call.1} parent=1 // pred_check_branch
      %38 = sbr.rel (%p36) target = $region21
    $region20: #{tpu_custom_call.1} parent=1 // pred_region
      %vm39 = vcmask 7168
      %40 = vst.msk [vmem:[#allocation2] sm:$0xff] %vm39, 0.0
      %41 = vst.msk [vmem:[#allocation3] sm:$0xff] %vm39, 0.0
      %42 = vst.msk [vmem:[#allocation4] sm:$0xff] %vm39, 0.0
    $region21: #{tpu_custom_call.1} parent=1 // pred_fallthru
      _
    %v43 = vld [vmem:[#allocation5] sm:$0xff]
    %v44 = vld [vmem:[#allocation7] sm:$0xff]
    %v45 = vld [vmem:[#allocation2] sm:$0xff]
    %v46 = vmul.f32 %v43, %v44
    %47 = vadd.xlane.f32.xlu0 %v46
    %v48 = vpop.xlane.xlu0 %47
    %v49 = vadd.f32 %v45, %v48
    %vm50 = vcmask 7168
    %51 = vst.msk [vmem:[#allocation2] sm:$0xff] %vm50, %v49
    %v52 = vld [vmem:[#allocation3] sm:$0xff]
    %v53 = vmul.f32 %v43, %v43
    %54 = vadd.xlane.f32.xlu0 %v53
    %v55 = vpop.xlane.xlu0 %54
    %v56 = vadd.f32 %v52, %v55
    %57 = vst.msk [vmem:[#allocation3] sm:$0xff] %vm50, %v56
    %v58 = vld [vmem:[#allocation4] sm:$0xff]
    %v59 = vmul.f32 %v44, %v44
    %60 = vadd.xlane.f32.xlu0 %v59
    %v61 = vpop.xlane.xlu0 %60
    %v62 = vadd.f32 %v58, %v61
    %63 = vst.msk [vmem:[#allocation4] sm:$0xff] %vm50, %v62
    // Predicated region
    $region22: #{tpu_custom_call.1} parent=1 // pred_check
      %p64 = pneg %p35
    $region23: #{tpu_custom_call.1} parent=1 // pred_check_branch
      %66 = sbr.rel (%p64) target = $region25
    $region24: #{tpu_custom_call.1} parent=1 // pred_region
      %v67 = vld [vmem:[#allocation3] sm:$0xff]
      %v68 = vld [vmem:[#allocation4] sm:$0xff]
      %v69 = vmul.f32 %v67, %v68
      %v70 = vmax.f32 %v69, 1e-16
      %v71 = vld [vmem:[#allocation2] sm:$0xff]
      %v72 = vrsqrt.pop %v70
      %v73 = vmul.f32 %v71, %v72
      %v74 = vsub.f32 1.0, %v73
      %75 = vst.msk [vmem:[%s2] sm:$0xff] %vm50, %v74
    $region25: #{tpu_custom_call.1} parent=1 // pred_fallthru
      _
    // Predicated region
    $region26: #{tpu_custom_call.1} parent=1 // pred_check
      _
    $region27: #{tpu_custom_call.1} parent=1 // pred_check_branch
      %77 = sbr.rel (0) target = $region29
    $region28: #{tpu_custom_call.1} parent=1 // pred_region
      _
    $region29: #{tpu_custom_call.1} parent=1 // pred_fallthru
      _
    // Predicated region
    $region30: #{tpu_custom_call.1} parent=1 // pred_check
      _
    $region31: #{tpu_custom_call.1} parent=1 // pred_check_branch
      %79 = sbr.rel (0) target = $region33
    $region32: #{tpu_custom_call.1} parent=1 // pred_region
      _
    $region33: #{tpu_custom_call.1} parent=1 // pred_fallthru
      _
    %80 = vsyncpa [#allocation6], 1
    %81 = vsyncpa [#allocation8], 1

</llo_original>
